<compile_context>
chip_gen: v5e
topology: v5e:2x2
jax: 0.10.0
libtpu: 0.0.40
codegen_flags: <defaults>
</compile_context>

<pallas_src>
import functools

import jax
import jax.numpy as jnp
from jax.experimental import pallas as pl
from jax.experimental.pallas import tpu as pltpu


# --------------------------------------------------------------------------
# Kernel
# --------------------------------------------------------------------------
def _make_block_b_kernel(block_batch, H):
    """Build the kernel for one (Bt*H, W*C) activation slab."""
    M = block_batch * H

    def kernel(x_ref, w1_ref, b1_ref, w2_ref, b2_ref, out_ref):
        # x_ref  : (M, W*Cin)        f32   Bt images stacked along rows
        # w1_ref : (3, W*Cin, W*Cin)  bf16 per-vertical-tap banded conv1 weight
        # b1_ref : (1, W*Cin)        f32
        # w2_ref : (3, W*Cin, W*Cout) bf16 per-vertical-tap banded conv2 weight
        # b2_ref : (1, W*Cout)       f32
        # out_ref: (M, W*Cout)       f32   lane-dense output slab
        x = x_ref[...]

        # Rows that have no h-1 / h+1 neighbour (per-image borders inside the
        # stacked slab).  Only needed when >1 image is packed into the block.
        if block_batch > 1:
            row = jax.lax.broadcasted_iota(jnp.int32, (M, 1), 0)
            has_up = (row % H) != 0
            has_dn = (row % H) != (H - 1)
        else:
            has_up = has_dn = None

        def vertical_taps(a):
            # a[h-1] / a[h+1] via sublane shift with zero border rows.
            z = jnp.zeros((1, a.shape[1]), a.dtype)
            up = jnp.concatenate([z, a[:-1, :]], axis=0)
            dn = jnp.concatenate([a[1:, :], z], axis=0)
            if has_up is not None:   # zero rows at interior image boundaries
                up = jnp.where(has_up, up, 0.0)
                dn = jnp.where(has_dn, dn, 0.0)
            return up, dn

        def conv3x3(a, w_ref):
            # One 3x3 SAME conv = 3 accumulated MXU matmuls (bf16 in, f32 acc).
            up, dn = vertical_taps(a)
            acc = jnp.dot(up.astype(jnp.bfloat16), w_ref[0],
                          preferred_element_type=jnp.float32)
            acc += jnp.dot(a.astype(jnp.bfloat16), w_ref[1],
                           preferred_element_type=jnp.float32)
            acc += jnp.dot(dn.astype(jnp.bfloat16), w_ref[2],
                           preferred_element_type=jnp.float32)
            return acc

        # conv1 + BN1 + ReLU, then residual add (epilogue math in f32).
        y1 = jnp.maximum(conv3x3(x, w1_ref) + b1_ref[...], 0.0) + x
        # conv2 + BN2 + ReLU (lane-dense store).
        out_ref[...] = jnp.maximum(conv3x3(y1, w2_ref) + b2_ref[...], 0.0)

    return kernel


# --------------------------------------------------------------------------
# Parameter preparation (hoisted out of the per-call path; run once)
# --------------------------------------------------------------------------
def _build_banded_weights(w_hwio, W):
    """Fold a 3x3 SAME conv (HWIO) into per-vertical-tap banded matrices.

    Returns (3, W*Ci, W*Co): tap kh multiplies the activation row h+kh-1.
    Row index of tap kh: k = w_in*Ci + ci ; col index n = w*Co + o ;
    value = w_hwio[kh, w_in - w + 1, ci, o] if |w_in - w| <= 1 else 0.
    """
    KH, KW, Ci, Co = w_hwio.shape
    w_in = jnp.arange(W)[:, None]
    w_out = jnp.arange(W)[None, :]
    kw = w_in - w_out + (KW // 2)                            # (W, W)
    valid = (kw >= 0) & (kw < KW)
    kw_c = jnp.clip(kw, 0, KW - 1)
    sel = w_hwio[:, kw_c, :, :]                              # (KH, W, W, Ci, Co)
    sel = jnp.where(valid[None, :, :, None, None], sel, 0.0)
    sel = jnp.transpose(sel, (0, 1, 3, 2, 4))                # (kh, w_in, ci, w, o)
    return sel.reshape(KH, W * Ci, W * Co)


def prepare_block_b_params(w1, b1, w2, b2, W, compute_dtype=jnp.bfloat16):
    """One-time (model-init) prep: banded bf16 weights + width-tiled f32 biases."""
    w1b = _build_banded_weights(w1, W).astype(compute_dtype)   # (3, W*Ci, W*Ci)
    w2b = _build_banded_weights(w2, W).astype(compute_dtype)   # (3, W*Ci, W*Co)
    b1r = jnp.tile(b1, W).reshape(1, -1).astype(jnp.float32)   # (1, W*Ci)
    b2r = jnp.tile(b2, W).reshape(1, -1).astype(jnp.float32)   # (1, W*Co)
    return w1b, b1r, w2b, b2r


def _pick_block_batch(B, H, target_m=256):
    """Largest divisor of B with Bt*H <= target_m (fills MXU rows)."""
    bt = max(1, min(B, max(1, target_m // H)))
    while B % bt:
        bt -= 1
    # Prefer >=2 grid steps (v7x megacore) when M would still be >=128.
    if B // bt < 2 and bt % 2 == 0 and (bt // 2) * H >= 128:
        bt //= 2
    return bt


# --------------------------------------------------------------------------
# Wrapper
# --------------------------------------------------------------------------
@functools.partial(jax.jit, static_argnames=("block_batch",))
def block_type_b(x_nhwc, params, block_batch=None):
    """x_nhwc: (B, H, W, Cin) f32; params from prepare_block_b_params."""
    w1b, b1r, w2b, b2r = params
    B, H, W, Cin = x_nhwc.shape
    WCi = W * Cin
    WCo = w2b.shape[-1]
    Cout = WCo // W

    Bt = block_batch if block_batch is not None else _pick_block_batch(B, H)
    assert B % Bt == 0, "block_batch must divide the batch size"
    M = Bt * H

    # Per-step VMEM footprint (Pallas double-buffers inputs by default).
    itemsize_w = jnp.dtype(w1b.dtype).itemsize
    vmem_bytes = (2 * 4 * M * (WCi + WCo)
                  + 2 * itemsize_w * (w1b.size + w2b.size)
                  + 2 * 4 * (WCi + WCo))
    # TODO(synk): for large W/C, tile the output-width dimension (banded
    # weights grow O(W^2*Cin*Cout)) instead of keeping them whole in VMEM
    # (v7x budget is 64 MiB).
    assert vmem_bytes < 32 * 1024 * 1024, (
        f"banded weights too large for VMEM ({vmem_bytes} B); tile the W axis")

    x2 = x_nhwc.reshape(B * H, WCi)                           # free reshape

    kernel = _make_block_b_kernel(Bt, H)

    flops = 2 * (B * H) * (3 * WCi) * (W * (Cin + Cout))
    bytes_accessed = int(4 * B * H * (WCi + WCo)
                         + itemsize_w * (w1b.size + w2b.size)
                         + 4 * (WCi + WCo))

    out2 = pl.pallas_call(
        kernel,
        out_shape=jax.ShapeDtypeStruct((B * H, WCo), jnp.float32),
        grid_spec=pltpu.PrefetchScalarGridSpec(
            num_scalar_prefetch=0,
            grid=(B // Bt,),
            in_specs=[
                pl.BlockSpec((M, WCi), lambda i: (i, 0)),
                pl.BlockSpec((3, WCi, WCi), lambda i: (0, 0, 0)),
                pl.BlockSpec((1, WCi), lambda i: (0, 0)),
                pl.BlockSpec((3, WCi, WCo), lambda i: (0, 0, 0)),
                pl.BlockSpec((1, WCo), lambda i: (0, 0)),
            ],
            out_specs=pl.BlockSpec((M, WCo), lambda i: (i, 0)),
        ),
        compiler_params=pltpu.CompilerParams(
            dimension_semantics=("parallel",)),
        cost_estimate=pl.CostEstimate(
            flops=flops, transcendentals=0, bytes_accessed=bytes_accessed),
    )(x2, w1b, b1r, w2b, b2r)

    return out2.reshape(B, H, W, Cout)                        # free reshape back


# --------------------------------------------------------------------------
# BN folding + pure-JAX references
# --------------------------------------------------------------------------
def _fold_bn(w_hwio, b, gamma, beta, mean, var, eps=1e-5):
    """Fold inference-mode BatchNorm into conv weight (HWIO) / bias."""
    scale = gamma / jnp.sqrt(var + eps)
    w_f = w_hwio * scale[None, None, None, :]
    b_f = (b - mean) * scale + beta
    return w_f, b_f


def _conv3x3_ref(x, w, b, compute_dtype=jnp.float32):
    y = jax.lax.conv_general_dilated(
        x.astype(compute_dtype), w.astype(compute_dtype),
        window_strides=(1, 1), padding="SAME",
        dimension_numbers=("NHWC", "HWIO", "NHWC"),
        preferred_element_type=jnp.float32,
        precision=jax.lax.Precision.HIGHEST)
    return y + b[None, None, None, :]


def _block_ref(x, w1, b1, w2, b2, compute_dtype=jnp.float32):
    y1 = jnp.maximum(_conv3x3_ref(x, w1, b1, compute_dtype), 0.0) + x
    return jnp.maximum(_conv3x3_ref(y1, w2, b2, compute_dtype), 0.0)


# --------------------------------------------------------------------------
if __name__ == "__main__":
    key = jax.random.PRNGKey(0)
    B, Cin, Cout, H, W = 2, 4, 8, 16, 16   # PyTorch input would be NCHW (2,4,16,16)

    ks = jax.random.split(key, 9)
    x_nchw = jax.random.normal(ks[0], (B, Cin, H, W), jnp.float32)
    x = jnp.transpose(x_nchw, (0, 2, 3, 1))                        # NCHW -> NHWC

    # conv1 params (in_c -> in_c) + BN1 stats
    w1 = 0.1 * jax.random.normal(ks[1], (3, 3, Cin, Cin), jnp.float32)   # HWIO
    cb1 = 0.1 * jax.random.normal(ks[2], (Cin,), jnp.float32)
    g1 = 1.0 + 0.05 * jax.random.normal(ks[3], (Cin,), jnp.float32)
    be1 = 0.05 * jax.random.normal(ks[4], (Cin,), jnp.float32)
    m1 = jnp.zeros((Cin,), jnp.float32)
    v1 = jnp.ones((Cin,), jnp.float32)

    # conv2 params (in_c -> out_c) + BN2 stats
    w2 = 0.1 * jax.random.normal(ks[5], (3, 3, Cin, Cout), jnp.float32)  # HWIO
    cb2 = 0.1 * jax.random.normal(ks[6], (Cout,), jnp.float32)
    g2 = 1.0 + 0.05 * jax.random.normal(ks[7], (Cout,), jnp.float32)
    be2 = 0.05 * jax.random.normal(ks[8], (Cout,), jnp.float32)
    m2 = jnp.zeros((Cout,), jnp.float32)
    v2 = jnp.ones((Cout,), jnp.float32)

    # Fold BN (inference mode) into conv weights/biases.
    w1f, b1f = _fold_bn(w1, cb1, g1, be1, m1, v1)
    w2f, b2f = _fold_bn(w2, cb2, g2, be2, m2, v2)

    # One-time parameter prep (banded bf16 weights, tiled biases).
    params = prepare_block_b_params(w1f, b1f, w2f, b2f, W)

    out = block_type_b(x, params)
    out = jax.block_until_ready(out)
    assert out.shape == (B, H, W, Cout)

    # Matched-precision reference (bf16 matmul inputs, f32 accumulate) — tight.
    ref_bf16 = _block_ref(x, w1f, b1f, w2f, b2f, jnp.bfloat16)
    err_bf16 = float(jnp.max(jnp.abs(out - ref_bf16)))
    assert err_bf16 < 2e-3, f"mismatch vs bf16-matched reference: {err_bf16}"

    # Full-f32 reference — loose bound covering bf16 input rounding.
    ref_f32 = _block_ref(x, w1f, b1f, w2f, b2f, jnp.float32)
    err_f32 = float(jnp.max(jnp.abs(out - ref_f32)))
    assert err_f32 < 6e-2, f"mismatch vs f32 reference: {err_f32}"

    print("KERNEL_OK")
</pallas_src>

<mosaic_0001>
module attributes {stable_mosaic.version = 11 : i64} {
  func.func @kernel(%arg0: i32, %arg1: memref<32x64xf32, #tpu.memory_space<vmem>>, %arg2: memref<3x64x64xbf16, #tpu.memory_space<vmem>>, %arg3: memref<1x64xf32, #tpu.memory_space<vmem>>, %arg4: memref<3x64x128xbf16, #tpu.memory_space<vmem>>, %arg5: memref<1x128xf32, #tpu.memory_space<vmem>>, %arg6: memref<32x128xf32, #tpu.memory_space<vmem>>) attributes {dimension_semantics = [#tpu.dimension_semantics<parallel>], iteration_bounds = array<i64: 1>, scalar_prefetch = 0 : i64, scratch_operands = 0 : i64, tpu.core_type = #tpu.core_type<tc>, window_params = [{transform_indices = @transform_0, window_bounds = array<i64: 32, 64>}, {pipeline_mode = #tpu.pipeline_mode<synchronous>, transform_indices = @transform_1, window_bounds = array<i64: 3, 64, 64>}, {pipeline_mode = #tpu.pipeline_mode<synchronous>, transform_indices = @transform_2, window_bounds = array<i64: 1, 64>}, {pipeline_mode = #tpu.pipeline_mode<synchronous>, transform_indices = @transform_3, window_bounds = array<i64: 3, 64, 128>}, {pipeline_mode = #tpu.pipeline_mode<synchronous>, transform_indices = @transform_4, window_bounds = array<i64: 1, 128>}, {transform_indices = @transform_5, window_bounds = array<i64: 32, 128>}]} {
    %c0 = arith.constant 0 : index
    %c0_0 = arith.constant 0 : index
    %0 = vector.load %arg1[%c0, %c0_0] : memref<32x64xf32, #tpu.memory_space<vmem>>, vector<32x64xf32>
    %1 = tpu.iota {dimensions = array<i32: 0>} : vector<32x1xi32>
    %c16_i32 = arith.constant 16 : i32
    %c0_i32 = arith.constant 0 : i32
    %2 = arith.cmpi eq, %c16_i32, %c0_i32 : i32
    %c1_i32 = arith.constant 1 : i32
    %3 = arith.select %2, %c1_i32, %c16_i32 : i32
    %4 = vector.broadcast %3 : i32 to vector<32x1xi32>
    %5 = arith.remsi %1, %4 : vector<32x1xi32>
    %c0_i32_1 = arith.constant 0 : i32
    %6 = vector.broadcast %c0_i32_1 : i32 to vector<32x1xi32>
    %7 = arith.cmpi ne, %5, %6 : vector<32x1xi32>
    %c0_i32_2 = arith.constant 0 : i32
    %8 = vector.broadcast %c0_i32_2 : i32 to vector<32x1xi32>
    %9 = arith.cmpi slt, %5, %8 : vector<32x1xi32>
    %c0_i32_3 = arith.constant 0 : i32
    %10 = arith.cmpi slt, %3, %c0_i32_3 : i32
    %11 = vector.broadcast %10 : i1 to vector<32x1xi1>
    %12 = vector.broadcast %11 : vector<32x1xi1> to vector<32x1xi1>
    %13 = arith.xori %9, %12 : vector<32x1xi1>
    %14 = arith.andi %13, %7 : vector<32x1xi1>
    %15 = vector.broadcast %3 : i32 to vector<32x1xi32>
    %16 = arith.addi %5, %15 : vector<32x1xi32>
    %17 = arith.select %14, %16, %5 : vector<32x1xi1>, vector<32x1xi32>
    %c0_i32_4 = arith.constant 0 : i32
    %18 = vector.broadcast %c0_i32_4 : i32 to vector<32x1xi32>
    %19 = arith.cmpi ne, %17, %18 : vector<32x1xi32>
    %c16_i32_5 = arith.constant 16 : i32
    %c0_i32_6 = arith.constant 0 : i32
    %20 = arith.cmpi eq, %c16_i32_5, %c0_i32_6 : i32
    %c1_i32_7 = arith.constant 1 : i32
    %21 = arith.select %20, %c1_i32_7, %c16_i32_5 : i32
    %22 = vector.broadcast %21 : i32 to vector<32x1xi32>
    %23 = arith.remsi %1, %22 : vector<32x1xi32>
    %c0_i32_8 = arith.constant 0 : i32
    %24 = vector.broadcast %c0_i32_8 : i32 to vector<32x1xi32>
    %25 = arith.cmpi ne, %23, %24 : vector<32x1xi32>
    %c0_i32_9 = arith.constant 0 : i32
    %26 = vector.broadcast %c0_i32_9 : i32 to vector<32x1xi32>
    %27 = arith.cmpi slt, %23, %26 : vector<32x1xi32>
    %c0_i32_10 = arith.constant 0 : i32
    %28 = arith.cmpi slt, %21, %c0_i32_10 : i32
    %29 = vector.broadcast %28 : i1 to vector<32x1xi1>
    %30 = vector.broadcast %29 : vector<32x1xi1> to vector<32x1xi1>
    %31 = arith.xori %27, %30 : vector<32x1xi1>
    %32 = arith.andi %31, %25 : vector<32x1xi1>
    %33 = vector.broadcast %21 : i32 to vector<32x1xi32>
    %34 = arith.addi %23, %33 : vector<32x1xi32>
    %35 = arith.select %32, %34, %23 : vector<32x1xi1>, vector<32x1xi32>
    %c15_i32 = arith.constant 15 : i32
    %36 = vector.broadcast %c15_i32 : i32 to vector<32x1xi32>
    %37 = arith.cmpi ne, %35, %36 : vector<32x1xi32>
    %cst = arith.constant 0.000000e+00 : f32
    %38 = vector.broadcast %cst : f32 to vector<1x64xf32>
    %39 = vector.extract_strided_slice %0 {offsets = [0, 0], sizes = [31, 64], strides = [1, 1]} : vector<32x64xf32> to vector<31x64xf32>
    %40 = tpu.concatenate %38, %39 in 0 : vector<1x64xf32>, vector<31x64xf32> -> vector<32x64xf32>
    %41 = vector.extract_strided_slice %0 {offsets = [1, 0], sizes = [31, 64], strides = [1, 1]} : vector<32x64xf32> to vector<31x64xf32>
    %42 = tpu.concatenate %41, %38 in 0 : vector<31x64xf32>, vector<1x64xf32> -> vector<32x64xf32>
    %cst_11 = arith.constant 0.000000e+00 : f32
    %43 = vector.shape_cast %19 : vector<32x1xi1> to vector<32x1xi1>
    %44 = vector.broadcast %43 : vector<32x1xi1> to vector<32x64xi1>
    %45 = vector.broadcast %cst_11 : f32 to vector<32x64xf32>
    %46 = arith.select %44, %40, %45 : vector<32x64xi1>, vector<32x64xf32>
    %cst_12 = arith.constant 0.000000e+00 : f32
    %47 = vector.shape_cast %37 : vector<32x1xi1> to vector<32x1xi1>
    %48 = vector.broadcast %47 : vector<32x1xi1> to vector<32x64xi1>
    %49 = vector.broadcast %cst_12 : f32 to vector<32x64xf32>
    %50 = arith.select %48, %42, %49 : vector<32x64xi1>, vector<32x64xf32>
    %51 = arith.truncf %46 : vector<32x64xf32> to vector<32x64xbf16>
    %c0_13 = arith.constant 0 : index
    %c0_14 = arith.constant 0 : index
    %c0_15 = arith.constant 0 : index
    %52 = vector.load %arg2[%c0_13, %c0_14, %c0_15] : memref<3x64x64xbf16, #tpu.memory_space<vmem>>, vector<1x64x64xbf16>
    %53 = vector.shape_cast %52 : vector<1x64x64xbf16> to vector<64x64xbf16>
    %cst_16 = arith.constant dense<0.000000e+00> : vector<32x64xf32>
    %54 = tpu.matmul %51, %53, %cst_16 {dimension_numbers = #tpu.dot_dimension_numbers<[1], [0], [0], [1], [0, 0, 1, 1], [], []>} : vector<32x64xbf16>, vector<64x64xbf16>, vector<32x64xf32> -> vector<32x64xf32>
    %55 = arith.truncf %0 : vector<32x64xf32> to vector<32x64xbf16>
    %c1 = arith.constant 1 : index
    %c0_17 = arith.constant 0 : index
    %c0_18 = arith.constant 0 : index
    %56 = vector.load %arg2[%c1, %c0_17, %c0_18] : memref<3x64x64xbf16, #tpu.memory_space<vmem>>, vector<1x64x64xbf16>
    %57 = vector.shape_cast %56 : vector<1x64x64xbf16> to vector<64x64xbf16>
    %cst_19 = arith.constant dense<0.000000e+00> : vector<32x64xf32>
    %58 = tpu.matmul %55, %57, %cst_19 {dimension_numbers = #tpu.dot_dimension_numbers<[1], [0], [0], [1], [0, 0, 1, 1], [], []>} : vector<32x64xbf16>, vector<64x64xbf16>, vector<32x64xf32> -> vector<32x64xf32>
    %59 = arith.addf %54, %58 : vector<32x64xf32>
    %60 = arith.truncf %50 : vector<32x64xf32> to vector<32x64xbf16>
    %c2 = arith.constant 2 : index
    %c0_20 = arith.constant 0 : index
    %c0_21 = arith.constant 0 : index
    %61 = vector.load %arg2[%c2, %c0_20, %c0_21] : memref<3x64x64xbf16, #tpu.memory_space<vmem>>, vector<1x64x64xbf16>
    %62 = vector.shape_cast %61 : vector<1x64x64xbf16> to vector<64x64xbf16>
    %cst_22 = arith.constant dense<0.000000e+00> : vector<32x64xf32>
    %63 = tpu.matmul %60, %62, %cst_22 {dimension_numbers = #tpu.dot_dimension_numbers<[1], [0], [0], [1], [0, 0, 1, 1], [], []>} : vector<32x64xbf16>, vector<64x64xbf16>, vector<32x64xf32> -> vector<32x64xf32>
    %64 = arith.addf %59, %63 : vector<32x64xf32>
    %c0_23 = arith.constant 0 : index
    %c0_24 = arith.constant 0 : index
    %65 = vector.load %arg3[%c0_23, %c0_24] : memref<1x64xf32, #tpu.memory_space<vmem>>, vector<1x64xf32>
    %66 = vector.broadcast %65 : vector<1x64xf32> to vector<32x64xf32>
    %67 = arith.addf %64, %66 : vector<32x64xf32>
    %cst_25 = arith.constant 0.000000e+00 : f32
    %68 = vector.broadcast %cst_25 : f32 to vector<32x64xf32>
    %69 = arith.maximumf %67, %68 : vector<32x64xf32>
    %70 = arith.addf %69, %0 : vector<32x64xf32>
    %cst_26 = arith.constant 0.000000e+00 : f32
    %71 = vector.broadcast %cst_26 : f32 to vector<1x64xf32>
    %72 = vector.extract_strided_slice %70 {offsets = [0, 0], sizes = [31, 64], strides = [1, 1]} : vector<32x64xf32> to vector<31x64xf32>
    %73 = tpu.concatenate %71, %72 in 0 : vector<1x64xf32>, vector<31x64xf32> -> vector<32x64xf32>
    %74 = vector.extract_strided_slice %70 {offsets = [1, 0], sizes = [31, 64], strides = [1, 1]} : vector<32x64xf32> to vector<31x64xf32>
    %75 = tpu.concatenate %74, %71 in 0 : vector<31x64xf32>, vector<1x64xf32> -> vector<32x64xf32>
    %cst_27 = arith.constant 0.000000e+00 : f32
    %76 = vector.shape_cast %19 : vector<32x1xi1> to vector<32x1xi1>
    %77 = vector.broadcast %76 : vector<32x1xi1> to vector<32x64xi1>
    %78 = vector.broadcast %cst_27 : f32 to vector<32x64xf32>
    %79 = arith.select %77, %73, %78 : vector<32x64xi1>, vector<32x64xf32>
    %cst_28 = arith.constant 0.000000e+00 : f32
    %80 = vector.shape_cast %37 : vector<32x1xi1> to vector<32x1xi1>
    %81 = vector.broadcast %80 : vector<32x1xi1> to vector<32x64xi1>
    %82 = vector.broadcast %cst_28 : f32 to vector<32x64xf32>
    %83 = arith.select %81, %75, %82 : vector<32x64xi1>, vector<32x64xf32>
    %84 = arith.truncf %79 : vector<32x64xf32> to vector<32x64xbf16>
    %c0_29 = arith.constant 0 : index
    %c0_30 = arith.constant 0 : index
    %c0_31 = arith.constant 0 : index
    %85 = vector.load %arg4[%c0_29, %c0_30, %c0_31] : memref<3x64x128xbf16, #tpu.memory_space<vmem>>, vector<1x64x128xbf16>
    %86 = vector.shape_cast %85 : vector<1x64x128xbf16> to vector<64x128xbf16>
    %cst_32 = arith.constant dense<0.000000e+00> : vector<32x128xf32>
    %87 = tpu.matmul %84, %86, %cst_32 {dimension_numbers = #tpu.dot_dimension_numbers<[1], [0], [0], [1], [0, 0, 1, 1], [], []>} : vector<32x64xbf16>, vector<64x128xbf16>, vector<32x128xf32> -> vector<32x128xf32>
    %88 = arith.truncf %70 : vector<32x64xf32> to vector<32x64xbf16>
    %c1_33 = arith.constant 1 : index
    %c0_34 = arith.constant 0 : index
    %c0_35 = arith.constant 0 : index
    %89 = vector.load %arg4[%c1_33, %c0_34, %c0_35] : memref<3x64x128xbf16, #tpu.memory_space<vmem>>, vector<1x64x128xbf16>
    %90 = vector.shape_cast %89 : vector<1x64x128xbf16> to vector<64x128xbf16>
    %cst_36 = arith.constant dense<0.000000e+00> : vector<32x128xf32>
    %91 = tpu.matmul %88, %90, %cst_36 {dimension_numbers = #tpu.dot_dimension_numbers<[1], [0], [0], [1], [0, 0, 1, 1], [], []>} : vector<32x64xbf16>, vector<64x128xbf16>, vector<32x128xf32> -> vector<32x128xf32>
    %92 = arith.addf %87, %91 : vector<32x128xf32>
    %93 = arith.truncf %83 : vector<32x64xf32> to vector<32x64xbf16>
    %c2_37 = arith.constant 2 : index
    %c0_38 = arith.constant 0 : index
    %c0_39 = arith.constant 0 : index
    %94 = vector.load %arg4[%c2_37, %c0_38, %c0_39] : memref<3x64x128xbf16, #tpu.memory_space<vmem>>, vector<1x64x128xbf16>
    %95 = vector.shape_cast %94 : vector<1x64x128xbf16> to vector<64x128xbf16>
    %cst_40 = arith.constant dense<0.000000e+00> : vector<32x128xf32>
    %96 = tpu.matmul %93, %95, %cst_40 {dimension_numbers = #tpu.dot_dimension_numbers<[1], [0], [0], [1], [0, 0, 1, 1], [], []>} : vector<32x64xbf16>, vector<64x128xbf16>, vector<32x128xf32> -> vector<32x128xf32>
    %97 = arith.addf %92, %96 : vector<32x128xf32>
    %c0_41 = arith.constant 0 : index
    %c0_42 = arith.constant 0 : index
    %98 = vector.load %arg5[%c0_41, %c0_42] : memref<1x128xf32, #tpu.memory_space<vmem>>, vector<1x128xf32>
    %99 = vector.broadcast %98 : vector<1x128xf32> to vector<32x128xf32>
    %100 = arith.addf %97, %99 : vector<32x128xf32>
    %cst_43 = arith.constant 0.000000e+00 : f32
    %101 = vector.broadcast %cst_43 : f32 to vector<32x128xf32>
    %102 = arith.maximumf %100, %101 : vector<32x128xf32>
    %c0_44 = arith.constant 0 : index
    %c0_45 = arith.constant 0 : index
    %103 = vector.load %arg6[%c0_44, %c0_45] : memref<32x128xf32, #tpu.memory_space<vmem>>, vector<32x128xf32>
    tpu.vector_store %arg6[%c0_44, %c0_45], %102 {strides = array<i32>} : memref<32x128xf32, #tpu.memory_space<vmem>>, vector<32x128xf32>,
    return
  }
  func.func @transform_0(%arg0: i32) -> (i32, i32) {
    %c0_i32 = arith.constant 0 : i32
    %c0_i32_0 = arith.constant 0 : i32
    return %arg0, %c0_i32 : i32, i32
  }
  func.func @transform_1(%arg0: i32) -> (i32, i32, i32) {
    %c0_i32 = arith.constant 0 : i32
    %c0_i32_0 = arith.constant 0 : i32
    %c0_i32_1 = arith.constant 0 : i32
    %c0_i32_2 = arith.constant 0 : i32
    return %c0_i32, %c0_i32_0, %c0_i32_1 : i32, i32, i32
  }
  func.func @transform_2(%arg0: i32) -> (i32, i32) {
    %c0_i32 = arith.constant 0 : i32
    %c0_i32_0 = arith.constant 0 : i32
    %c0_i32_1 = arith.constant 0 : i32
    return %c0_i32, %c0_i32_0 : i32, i32
  }
  func.func @transform_3(%arg0: i32) -> (i32, i32, i32) {
    %c0_i32 = arith.constant 0 : i32
    %c0_i32_0 = arith.constant 0 : i32
    %c0_i32_1 = arith.constant 0 : i32
    %c0_i32_2 = arith.constant 0 : i32
    return %c0_i32, %c0_i32_0, %c0_i32_1 : i32, i32, i32
  }
  func.func @transform_4(%arg0: i32) -> (i32, i32) {
    %c0_i32 = arith.constant 0 : i32
    %c0_i32_0 = arith.constant 0 : i32
    %c0_i32_1 = arith.constant 0 : i32
    return %c0_i32, %c0_i32_0 : i32, i32
  }
  func.func @transform_5(%arg0: i32) -> (i32, i32) {
    %c0_i32 = arith.constant 0 : i32
    %c0_i32_0 = arith.constant 0 : i32
    return %arg0, %c0_i32 : i32, i32
  }
}

</mosaic_0001>

<llo_original>
// kernel: block_type_b.1
$region0: #{block_type_b.1}
  #allocation0 [shape = 'u32[]', space=smem, size = 0x4, offset = 0x4, fixed_abs, tag = 'smem constant byte address 0x4 - core index']
  #allocation1 [shape = 'u32[72,128]{1,0:T(1,128)}', space=vmem, size = 0x9000, scoped, tag = 'internal scratch']
  %s0 = inlined_call_operand.vmem [shape: f32[32,64], index: 0, kind: input, shape index: {}]
  %s1 = inlined_call_operand.vmem [shape: bf16[3,64,64], index: 1, kind: input, shape index: {}]
  %s2 = inlined_call_operand.vmem [shape: f32[1,64], index: 2, kind: input, shape index: {}]
  %s3 = inlined_call_operand.vmem [shape: bf16[3,64,128], index: 3, kind: input, shape index: {}]
  %s4 = inlined_call_operand.vmem [shape: f32[1,128], index: 4, kind: input, shape index: {}]
  %s5 = inlined_call_operand.vmem [shape: f32[32,128], index: 5, kind: output, shape index: {}]
  %s6 = sld [smem:[#allocation0]]
  $region30: #{block_type_b.1} parent=0
    _
  %s8 = ssub.s32 1, %s6
  %s9 = scalar_select 0, %s8, %s6
  // Predicated region
  $region2: #{block_type_b.1} parent=0 // pred_check
    _
  $region3: #{block_type_b.1} parent=0 // pred_check_branch
    %11 = sbr.rel (0) target = $region5
  $region4: #{block_type_b.1} parent=0 // pred_region
    _
  $region5: #{block_type_b.1} parent=0 // pred_fallthru
    _
  // Predicated region
  $region6: #{block_type_b.1} parent=0 // pred_check
    _
  $region7: #{block_type_b.1} parent=0 // pred_check_branch
    %13 = sbr.rel (0) target = $region9
  $region8: #{block_type_b.1} parent=0 // pred_region
    _
  $region9: #{block_type_b.1} parent=0 // pred_fallthru
    _
  // Predicated region
  $region10: #{block_type_b.1} parent=0 // pred_check
    _
  $region11: #{block_type_b.1} parent=0 // pred_check_branch
    %15 = sbr.rel (0) target = $region13
  $region12: #{block_type_b.1} parent=0 // pred_region
    _
  $region13: #{block_type_b.1} parent=0 // pred_fallthru
    _
  // Predicated region
  $region14: #{block_type_b.1} parent=0 // pred_check
    _
  $region15: #{block_type_b.1} parent=0 // pred_check_branch
    %17 = sbr.rel (0) target = $region17
  $region16: #{block_type_b.1} parent=0 // pred_region
    _
  $region17: #{block_type_b.1} parent=0 // pred_fallthru
    _
  // Predicated region
  $region18: #{block_type_b.1} parent=0 // pred_check
    _
  $region19: #{block_type_b.1} parent=0 // pred_check_branch
    %19 = sbr.rel (0) target = $region21
  $region20: #{block_type_b.1} parent=0 // pred_region
    _
  $region21: #{block_type_b.1} parent=0 // pred_fallthru
    _
  %v21 = vld [vmem:[%s0] sm:$0xff]
  %v22 = vld [vmem:[%s0 + $0x8] sm:$0xff]
  %v23 = vld [vmem:[%s0 + $0x10] sm:$0xff]
  %v24 = vld [vmem:[%s0 + $0x18] sm:$0xff]
  %v25 = vlaneseq
  %v26 = vshrl.u32 %v25, 7
  %v27 = vadd.s32 %v26, 8
  %v28 = vadd.s32 %v26, 16
  %v29 = vadd.s32 %v26, 24
  %vm30 = vcmp.lt.s32.totalorder %v26, 0
  %v31 = vsub.s32 0, %v26
  %v32 = vsel %vm30, %v31, %v26
  %v33 = vshrl.u32 %v32, 4
  %v34 = vand.u32 %v32, 15
  %v35 = vsub.s32 0, %v34
  %v36 = vsel %vm30, %v35, %v34
  %vm37 = vcmp.lt.s32.totalorder %v27, 0
  %v38 = vsub.s32 0, %v27
  %v39 = vsel %vm37, %v38, %v27
  %v40 = vshrl.u32 %v39, 4
  %v41 = vand.u32 %v39, 15
  %v42 = vsub.s32 0, %v41
  %v43 = vsel %vm37, %v42, %v41
  %vm44 = vcmp.lt.s32.totalorder %v28, 0
  %v45 = vsub.s32 0, %v28
  %v46 = vsel %vm44, %v45, %v28
  %v47 = vshrl.u32 %v46, 4
  %v48 = vand.u32 %v46, 15
  %v49 = vsub.s32 0, %v48
  %v50 = vsel %vm44, %v49, %v48
  %vm51 = vcmp.lt.s32.totalorder %v29, 0
  %v52 = vsub.s32 0, %v29
  %v53 = vsel %vm51, %v52, %v29
  %v54 = vshrl.u32 %v53, 4
  %v55 = vand.u32 %v53, 15
  %v56 = vsub.s32 0, %v55
  %v57 = vsel %vm51, %v56, %v55
  %vm58 = vcmp.ne.s32.totalorder %v36, 0
  %vm59 = vcmp.ne.s32.totalorder %v43, 0
  %vm60 = vcmp.ne.s32.totalorder %v50, 0
  %vm61 = vcmp.ne.s32.totalorder %v57, 0
  %vm62 = vcmp.lt.s32.totalorder %v36, 0
  %vm63 = vcmp.lt.s32.totalorder %v43, 0
  %vm64 = vcmp.lt.s32.totalorder %v50, 0
  %vm65 = vcmp.lt.s32.totalorder %v57, 0
  %vm66 = vmand %vm62, %vm58
  %vm67 = vmand %vm63, %vm59
  %vm68 = vmand %vm64, %vm60
  %vm69 = vmand %vm65, %vm61
  %v70 = vadd.s32 %v36, 16
  %v71 = vadd.s32 %v43, 16
  %v72 = vadd.s32 %v50, 16
  %v73 = vadd.s32 %v57, 16
  %v74 = vsel %vm66, %v70, %v36
  %v75 = vsel %vm67, %v71, %v43
  %v76 = vsel %vm68, %v72, %v50
  %v77 = vsel %vm69, %v73, %v57
  %vm78 = vcmp.ne.s32.totalorder %v74, 0
  %vm79 = vcmp.ne.s32.totalorder %v75, 0
  %vm80 = vcmp.ne.s32.totalorder %v76, 0
  %vm81 = vcmp.ne.s32.totalorder %v77, 0
  %vm82 = vcmp.ne.s32.totalorder %v74, 15
  %vm83 = vcmp.ne.s32.totalorder %v75, 15
  %vm84 = vcmp.ne.s32.totalorder %v76, 15
  %vm85 = vcmp.ne.s32.totalorder %v77, 15
  %vm90 = vcmask 1040384
  %v91 = vrot.slane %v21, 7
  %v92 = vrot.slane %v22, 7
  %v93 = vsel %vm90, %v91, %v92
  %v94 = vrot.slane %v23, 7
  %v95 = vsel %vm90, %v92, %v94
  %v96 = vrot.slane %v24, 7
  %v97 = vsel %vm90, %v94, %v96
  %v102 = vsel %vm90, 0.0, %v91
  %vm103 = vcmask 1046528
  %v104 = vrot.slane %v21, 1
  %v105 = vrot.slane %v22, 1
  %v106 = vsel %vm103, %v104, %v105
  %v107 = vrot.slane %v23, 1
  %v108 = vsel %vm103, %v105, %v107
  %v109 = vrot.slane %v24, 1
  %v110 = vsel %vm103, %v107, %v109
  %v115 = vsel %vm103, %v109, 0.0
  %v116 = vsel %vm78, 1, 0
  %v117 = vsel %vm79, 1, 0
  %v118 = vsel %vm80, 1, 0
  %v119 = vsel %vm81, 1, 0
  %vm120 = vcmp.eq.s32.totalorder %v116, 1
  %vm121 = vcmp.eq.s32.totalorder %v117, 1
  %vm122 = vcmp.eq.s32.totalorder %v118, 1
  %vm123 = vcmp.eq.s32.totalorder %v119, 1
  %v124 = vsel %vm120, %v102, 0.0
  %v125 = vsel %vm121, %v93, 0.0
  %v126 = vsel %vm122, %v95, 0.0
  %v127 = vsel %vm123, %v97, 0.0
  %v128 = vsel %vm82, 1, 0
  %v129 = vsel %vm83, 1, 0
  %v130 = vsel %vm84, 1, 0
  %v131 = vsel %vm85, 1, 0
  %vm132 = vcmp.eq.s32.totalorder %v128, 1
  %vm133 = vcmp.eq.s32.totalorder %v129, 1
  %vm134 = vcmp.eq.s32.totalorder %v130, 1
  %vm135 = vcmp.eq.s32.totalorder %v131, 1
  %v136 = vsel %vm132, %v106, 0.0
  %v137 = vsel %vm133, %v108, 0.0
  %v138 = vsel %vm134, %v110, 0.0
  %v139 = vsel %vm135, %v115, 0.0
  %v140 = vpack.c.bf16 %v125, %v124
  %v141 = vpack.c.bf16 %v127, %v126
  %v142 = vld [vmem:[%s1] sm:$0xf]
  %v143 = vld [vmem:[%s1 + $0x4] sm:$0xf]
  %v144 = vld [vmem:[%s1 + $0x8] sm:$0xf]
  %v145 = vld [vmem:[%s1 + $0xc] sm:$0xf]
  %v146 = vld [vmem:[%s1 + $0x10] sm:$0xf]
  %v147 = vld [vmem:[%s1 + $0x14] sm:$0xf]
  %v148 = vld [vmem:[%s1 + $0x18] sm:$0xf]
  %v149 = vld [vmem:[%s1 + $0x1c] sm:$0xf]
  %v150 = vpack.c.bf16 %v22, %v21
  %v151 = vpack.c.bf16 %v24, %v23
  %s152 = scalar_lea.vmem %s1, 32
  %v153 = vld [vmem:[%s152] sm:$0xf]
  %v154 = vld [vmem:[%s152 + $0x4] sm:$0xf]
  %v155 = vld [vmem:[%s152 + $0x8] sm:$0xf]
  %v156 = vld [vmem:[%s152 + $0xc] sm:$0xf]
  %v157 = vld [vmem:[%s152 + $0x10] sm:$0xf]
  %v158 = vld [vmem:[%s152 + $0x14] sm:$0xf]
  %v159 = vld [vmem:[%s152 + $0x18] sm:$0xf]
  %v160 = vld [vmem:[%s152 + $0x1c] sm:$0xf]
  %v169 = vunpack.c.l.b16 %v153
  %v170 = vunpack.c.l.b16 %v154
  %v171 = vunpack.c.l.b16 %v155
  %v172 = vunpack.c.l.b16 %v156
  %v173 = vunpack.c.l.b16 %v157
  %v174 = vunpack.c.l.b16 %v158
  %v175 = vunpack.c.l.b16 %v159
  %v176 = vunpack.c.l.b16 %v160
  %v177 = vpack.c.b16 %v170, %v169
  %v178 = vpack.c.b16 %v172, %v171
  %v179 = vpack.c.b16 %v174, %v173
  %v180 = vpack.c.b16 %v176, %v175
  %vm185 = vcmask 523264
  %v187 = vsel %vm185, %v150, 0
  %v190 = vsel %vm185, %v151, 0
  %192 = vmatpush.bf16.msra.mxu0 0
  %193 = vmatpush.bf16.msra.mxu0 0
  %194 = vmatpush.bf16.msra.mxu0 0
  %195 = vmatpush.bf16.msra.mxu0 0
  %196 = vmatpush.bf16.msra.mxu0 %v180
  %197 = vmatpush.bf16.msra.mxu0 %v179
  %198 = vmatpush.bf16.msra.mxu0 %v178
  %199 = vmatpush.bf16.msra.mxu0 %v177
  %200 = vmatmul.bf16.gmra.mxu0 %v187
  %v201 = vpop.f32.mrf.mxu0
  %v202 = vadd.f32 0.0, %v201
  %v203 = vpop.f32.mrf.mxu0
  %v204 = vadd.f32 0.0, %v203
  %205 = vmatmul.bf16.gmra.mxu0 %v190
  %v206 = vpop.f32.mrf.mxu0
  %v207 = vadd.f32 0.0, %v206
  %v208 = vpop.f32.mrf.mxu0
  %v209 = vadd.f32 0.0, %v208
  %210 = vdwg.mxu0
  %v219 = vunpack.c.l.b16 %v142
  %v220 = vunpack.c.l.b16 %v143
  %v221 = vunpack.c.l.b16 %v144
  %v222 = vunpack.c.l.b16 %v145
  %v223 = vunpack.c.l.b16 %v146
  %v224 = vunpack.c.l.b16 %v147
  %v225 = vunpack.c.l.b16 %v148
  %v226 = vunpack.c.l.b16 %v149
  %v227 = vpack.c.b16 %v220, %v219
  %v228 = vpack.c.b16 %v222, %v221
  %v229 = vpack.c.b16 %v224, %v223
  %v230 = vpack.c.b16 %v226, %v225
  %v236 = vsel %vm185, %v140, 0
  %v239 = vsel %vm185, %v141, 0
  %241 = vmatpush.bf16.msra.mxu0 0
  %242 = vmatpush.bf16.msra.mxu0 0
  %243 = vmatpush.bf16.msra.mxu0 0
  %244 = vmatpush.bf16.msra.mxu0 0
  %245 = vmatpush.bf16.msra.mxu0 %v230
  %246 = vmatpush.bf16.msra.mxu0 %v229
  %247 = vmatpush.bf16.msra.mxu0 %v228
  %248 = vmatpush.bf16.msra.mxu0 %v227
  %249 = vmatmul.bf16.gmra.mxu0 %v236
  %v250 = vpop.f32.mrf.mxu0
  %v251 = vadd.f32 %v202, %v250
  %v252 = vpop.f32.mrf.mxu0
  %v253 = vadd.f32 %v204, %v252
  %254 = vmatmul.bf16.gmra.mxu0 %v239
  %v255 = vpop.f32.mrf.mxu0
  %v256 = vadd.f32 %v207, %v255
  %v257 = vpop.f32.mrf.mxu0
  %v258 = vadd.f32 %v209, %v257
  %259 = vdwg.mxu0
  %v260 = vpack.c.bf16 %v137, %v136
  %v261 = vpack.c.bf16 %v139, %v138
  %s262 = scalar_lea.vmem %s1, 64
  %v263 = vld [vmem:[%s262] sm:$0xf]
  %v264 = vld [vmem:[%s262 + $0x4] sm:$0xf]
  %v265 = vld [vmem:[%s262 + $0x8] sm:$0xf]
  %v266 = vld [vmem:[%s262 + $0xc] sm:$0xf]
  %v267 = vld [vmem:[%s262 + $0x10] sm:$0xf]
  %v268 = vld [vmem:[%s262 + $0x14] sm:$0xf]
  %v269 = vld [vmem:[%s262 + $0x18] sm:$0xf]
  %v270 = vld [vmem:[%s262 + $0x1c] sm:$0xf]
  %v279 = vunpack.c.l.b16 %v263
  %v280 = vunpack.c.l.b16 %v264
  %v281 = vunpack.c.l.b16 %v265
  %v282 = vunpack.c.l.b16 %v266
  %v283 = vunpack.c.l.b16 %v267
  %v284 = vunpack.c.l.b16 %v268
  %v285 = vunpack.c.l.b16 %v269
  %v286 = vunpack.c.l.b16 %v270
  %v287 = vpack.c.b16 %v280, %v279
  %v288 = vpack.c.b16 %v282, %v281
  %v289 = vpack.c.b16 %v284, %v283
  %v290 = vpack.c.b16 %v286, %v285
  %v296 = vsel %vm185, %v260, 0
  %v299 = vsel %vm185, %v261, 0
  %301 = vmatpush.bf16.msra.mxu0 0
  %302 = vmatpush.bf16.msra.mxu0 0
  %303 = vmatpush.bf16.msra.mxu0 0
  %304 = vmatpush.bf16.msra.mxu0 0
  %305 = vmatpush.bf16.msra.mxu0 %v290
  %306 = vmatpush.bf16.msra.mxu0 %v289
  %307 = vmatpush.bf16.msra.mxu0 %v288
  %308 = vmatpush.bf16.msra.mxu0 %v287
  %309 = vmatmul.bf16.gmra.mxu0 %v296
  %v310 = vpop.f32.mrf.mxu0
  %v311 = vadd.f32 0.0, %v310
  %v312 = vpop.f32.mrf.mxu0
  %v313 = vadd.f32 0.0, %v312
  %314 = vmatmul.bf16.gmra.mxu0 %v299
  %v315 = vpop.f32.mrf.mxu0
  %v316 = vadd.f32 0.0, %v315
  %v317 = vpop.f32.mrf.mxu0
  %v318 = vadd.f32 0.0, %v317
  %319 = vdwg.mxu0
  %v320 = vadd.f32 %v251, %v311
  %v321 = vadd.f32 %v253, %v313
  %v322 = vadd.f32 %v256, %v316
  %v323 = vadd.f32 %v258, %v318
  %v324 = vld [vmem:[%s2] sm:$0x1]
  %v326 = vperm.slane %v324, 0
  %v328 = vadd.f32 %v320, %v326
  %v329 = vadd.f32 %v321, %v326
  %v330 = vadd.f32 %v322, %v326
  %v331 = vadd.f32 %v323, %v326
  %v332 = vmax.f32 %v328, 0.0
  %v333 = vmax.f32 %v329, 0.0
  %v334 = vmax.f32 %v330, 0.0
  %v335 = vmax.f32 %v331, 0.0
  %v336 = vadd.f32 %v332, %v21
  %v337 = vadd.f32 %v333, %v22
  %v338 = vadd.f32 %v334, %v23
  %v339 = vadd.f32 %v335, %v24
  %v344 = vrot.slane %v336, 7
  %v345 = vrot.slane %v337, 7
  %v346 = vsel %vm90, %v344, %v345
  %v347 = vrot.slane %v338, 7
  %v348 = vsel %vm90, %v345, %v347
  %v349 = vrot.slane %v339, 7
  %v350 = vsel %vm90, %v347, %v349
  %v355 = vsel %vm90, 0.0, %v344
  %v356 = vrot.slane %v336, 1
  %v357 = vrot.slane %v337, 1
  %v358 = vsel %vm103, %v356, %v357
  %v359 = vrot.slane %v338, 1
  %v360 = vsel %vm103, %v357, %v359
  %v361 = vrot.slane %v339, 1
  %v362 = vsel %vm103, %v359, %v361
  %v367 = vsel %vm103, %v361, 0.0
  %v368 = vsel %vm120, %v355, 0.0
  %v369 = vsel %vm121, %v346, 0.0
  %v370 = vsel %vm122, %v348, 0.0
  %v371 = vsel %vm123, %v350, 0.0
  %v372 = vsel %vm132, %v358, 0.0
  %v373 = vsel %vm133, %v360, 0.0
  %v374 = vsel %vm134, %v362, 0.0
  %v375 = vsel %vm135, %v367, 0.0
  %v376 = vpack.c.bf16 %v369, %v368
  %v377 = vpack.c.bf16 %v371, %v370
  %v378 = vld [vmem:[%s3] sm:$0xf]
  %v379 = vld [vmem:[%s3 + $0x4] sm:$0xf]
  %v380 = vld [vmem:[%s3 + $0x8] sm:$0xf]
  %v381 = vld [vmem:[%s3 + $0xc] sm:$0xf]
  %v382 = vld [vmem:[%s3 + $0x10] sm:$0xf]
  %v383 = vld [vmem:[%s3 + $0x14] sm:$0xf]
  %v384 = vld [vmem:[%s3 + $0x18] sm:$0xf]
  %v385 = vld [vmem:[%s3 + $0x1c] sm:$0xf]
  %v386 = vpack.c.bf16 %v337, %v336
  %v387 = vpack.c.bf16 %v339, %v338
  %s388 = scalar_lea.vmem %s3, 32
  %v389 = vld [vmem:[%s388] sm:$0xf]
  %v390 = vld [vmem:[%s388 + $0x4] sm:$0xf]
  %v391 = vld [vmem:[%s388 + $0x8] sm:$0xf]
  %v392 = vld [vmem:[%s388 + $0xc] sm:$0xf]
  %v393 = vld [vmem:[%s388 + $0x10] sm:$0xf]
  %v394 = vld [vmem:[%s388 + $0x14] sm:$0xf]
  %v395 = vld [vmem:[%s388 + $0x18] sm:$0xf]
  %v396 = vld [vmem:[%s388 + $0x1c] sm:$0xf]
  %v405 = vunpack.c.l.b16 %v389
  %v406 = vunpack.c.l.b16 %v390
  %v407 = vunpack.c.l.b16 %v391
  %v408 = vunpack.c.l.b16 %v392
  %v409 = vunpack.c.l.b16 %v393
  %v410 = vunpack.c.l.b16 %v394
  %v411 = vunpack.c.l.b16 %v395
  %v412 = vunpack.c.l.b16 %v396
  %v413 = vpack.c.b16 %v406, %v405
  %v414 = vpack.c.b16 %v408, %v407
  %v415 = vpack.c.b16 %v410, %v409
  %v416 = vpack.c.b16 %v412, %v411
  %v422 = vsel %vm185, %v386, 0
  %v425 = vsel %vm185, %v387, 0
  %427 = vmatpush.bf16.msra.mxu0 0
  %428 = vmatpush.bf16.msra.mxu0 0
  %429 = vmatpush.bf16.msra.mxu0 0
  %430 = vmatpush.bf16.msra.mxu0 0
  %431 = vmatpush.bf16.msra.mxu0 %v416
  %432 = vmatpush.bf16.msra.mxu0 %v415
  %433 = vmatpush.bf16.msra.mxu0 %v414
  %434 = vmatpush.bf16.msra.mxu0 %v413
  %435 = vmatmul.bf16.gmra.mxu0 %v422
  %v436 = vpop.f32.mrf.mxu0
  %v437 = vadd.f32 0.0, %v436
  %v438 = vpop.f32.mrf.mxu0
  %v439 = vadd.f32 0.0, %v438
  %440 = vmatmul.bf16.gmra.mxu0 %v425
  %v441 = vpop.f32.mrf.mxu0
  %v442 = vadd.f32 0.0, %v441
  %v443 = vpop.f32.mrf.mxu0
  %v444 = vadd.f32 0.0, %v443
  %445 = vdwg.mxu0
  %v454 = vunpack.c.l.b16 %v378
  %v455 = vunpack.c.l.b16 %v379
  %v456 = vunpack.c.l.b16 %v380
  %v457 = vunpack.c.l.b16 %v381
  %v458 = vunpack.c.l.b16 %v382
  %v459 = vunpack.c.l.b16 %v383
  %v460 = vunpack.c.l.b16 %v384
  %v461 = vunpack.c.l.b16 %v385
  %v462 = vpack.c.b16 %v455, %v454
  %v463 = vpack.c.b16 %v457, %v456
  %v464 = vpack.c.b16 %v459, %v458
  %v465 = vpack.c.b16 %v461, %v460
  %v471 = vsel %vm185, %v376, 0
  %v474 = vsel %vm185, %v377, 0
  %476 = vmatpush.bf16.msra.mxu0 0
  %477 = vmatpush.bf16.msra.mxu0 0
  %478 = vmatpush.bf16.msra.mxu0 0
  %479 = vmatpush.bf16.msra.mxu0 0
  %480 = vmatpush.bf16.msra.mxu0 %v465
  %481 = vmatpush.bf16.msra.mxu0 %v464
  %482 = vmatpush.bf16.msra.mxu0 %v463
  %483 = vmatpush.bf16.msra.mxu0 %v462
  %484 = vmatmul.bf16.gmra.mxu0 %v471
  %v485 = vpop.f32.mrf.mxu0
  %v486 = vadd.f32 %v437, %v485
  %v487 = vpop.f32.mrf.mxu0
  %v488 = vadd.f32 %v439, %v487
  %489 = vmatmul.bf16.gmra.mxu0 %v474
  %v490 = vpop.f32.mrf.mxu0
  %v491 = vadd.f32 %v442, %v490
  %v492 = vpop.f32.mrf.mxu0
  %v493 = vadd.f32 %v444, %v492
  %494 = vdwg.mxu0
  %v495 = vpack.c.bf16 %v373, %v372
  %v496 = vpack.c.bf16 %v375, %v374
  %s497 = scalar_lea.vmem %s3, 64
  %v498 = vld [vmem:[%s497] sm:$0xf]
  %v499 = vld [vmem:[%s497 + $0x4] sm:$0xf]
  %v500 = vld [vmem:[%s497 + $0x8] sm:$0xf]
  %v501 = vld [vmem:[%s497 + $0xc] sm:$0xf]
  %v502 = vld [vmem:[%s497 + $0x10] sm:$0xf]
  %v503 = vld [vmem:[%s497 + $0x14] sm:$0xf]
  %v504 = vld [vmem:[%s497 + $0x18] sm:$0xf]
  %v505 = vld [vmem:[%s497 + $0x1c] sm:$0xf]
  %v514 = vunpack.c.l.b16 %v498
  %v515 = vunpack.c.l.b16 %v499
  %v516 = vunpack.c.l.b16 %v500
  %v517 = vunpack.c.l.b16 %v501
  %v518 = vunpack.c.l.b16 %v502
  %v519 = vunpack.c.l.b16 %v503
  %v520 = vunpack.c.l.b16 %v504
  %v521 = vunpack.c.l.b16 %v505
  %v522 = vpack.c.b16 %v515, %v514
  %v523 = vpack.c.b16 %v517, %v516
  %v524 = vpack.c.b16 %v519, %v518
  %v525 = vpack.c.b16 %v521, %v520
  %v531 = vsel %vm185, %v495, 0
  %v534 = vsel %vm185, %v496, 0
  %536 = vmatpush.bf16.msra.mxu0 0
  %537 = vmatpush.bf16.msra.mxu0 0
  %538 = vmatpush.bf16.msra.mxu0 0
  %539 = vmatpush.bf16.msra.mxu0 0
  %540 = vmatpush.bf16.msra.mxu0 %v525
  %541 = vmatpush.bf16.msra.mxu0 %v524
  %542 = vmatpush.bf16.msra.mxu0 %v523
  %543 = vmatpush.bf16.msra.mxu0 %v522
  %544 = vmatmul.bf16.gmra.mxu0 %v531
  %v545 = vpop.f32.mrf.mxu0
  %v546 = vadd.f32 0.0, %v545
  %v547 = vpop.f32.mrf.mxu0
  %v548 = vadd.f32 0.0, %v547
  %549 = vmatmul.bf16.gmra.mxu0 %v534
  %v550 = vpop.f32.mrf.mxu0
  %v551 = vadd.f32 0.0, %v550
  %v552 = vpop.f32.mrf.mxu0
  %v553 = vadd.f32 0.0, %v552
  %554 = vdwg.mxu0
  %v555 = vadd.f32 %v486, %v546
  %v556 = vadd.f32 %v488, %v548
  %v557 = vadd.f32 %v491, %v551
  %v558 = vadd.f32 %v493, %v553
  %v559 = vld [vmem:[%s4] sm:$0x1]
  %v561 = vperm.slane %v559, 0
  %v563 = vadd.f32 %v555, %v561
  %v564 = vadd.f32 %v556, %v561
  %v565 = vadd.f32 %v557, %v561
  %v566 = vadd.f32 %v558, %v561
  %v567 = vmax.f32 %v563, 0.0
  %v568 = vmax.f32 %v564, 0.0
  %v569 = vmax.f32 %v565, 0.0
  %v570 = vmax.f32 %v566, 0.0
  %571 = vst [vmem:[%s5] sm:$0xff] %v567
  %572 = vst [vmem:[%s5 + $0x8] sm:$0xff] %v568
  %573 = vst [vmem:[%s5 + $0x10] sm:$0xff] %v569
  %574 = vst [vmem:[%s5 + $0x18] sm:$0xff] %v570
  // Predicated region
  $region22: #{block_type_b.1} parent=0 // pred_check
    _
  $region23: #{block_type_b.1} parent=0 // pred_check_branch
    %576 = sbr.rel (0) target = $region25
  $region24: #{block_type_b.1} parent=0 // pred_region
    _
  $region25: #{block_type_b.1} parent=0 // pred_fallthru
    _
  // Predicated region
  $region26: #{block_type_b.1} parent=0 // pred_check
    _
  $region27: #{block_type_b.1} parent=0 // pred_check_branch
    %578 = sbr.rel (0) target = $region29
  $region28: #{block_type_b.1} parent=0 // pred_region
    _
  $region29: #{block_type_b.1} parent=0 // pred_fallthru
    _

</llo_original>
